<compile_context>
chip_gen: v7x
topology: tpu7x:2x2x1
jax: 0.10.0
libtpu: 0.0.40
codegen_flags: <defaults>
</compile_context>

<pallas_src>
import functools

import jax
import jax.numpy as jnp
from jax import lax
from jax.experimental import pallas as pl
from jax.experimental.pallas import tpu as pltpu


# ----------------------------------------------------------------------------
# Kernels
# ----------------------------------------------------------------------------
def depthwise_conv_kernel(x_ref, w_ref, b_ref, o_ref, *, stride, ksize, mult,
                          out_h, out_w):
    """Grouped (depthwise, channel-multiplier) conv for one (batch, chan-tile).

    x_ref: (Hq, s*s, Wq, Ct)  space-to-depth phased, zero-padded input:
                              x_ref[r, ph*s+pw, q, c] == x_pad[r*s+ph, q*s+pw, c]
    w_ref: (k, k, mult, Ct)   per-tap / per-multiplier / per-channel weights
    b_ref: (mult, Ct)         bias
    o_ref: (out_h, mult, out_w, Ct)
    """
    s = stride
    ct = x_ref.shape[-1]

    def row_body(oh, carry):
        # Small per-row accumulators (a few vregs each) -> no spilling.
        accs = [jnp.zeros((out_w, ct), jnp.float32) for _ in range(mult)]
        for kh in range(ksize):          # static, k = s + 1
            row = oh + (kh // s)         # dynamic index on a leading dim: free
            ph = kh % s
            for kw in range(ksize):
                dw = kw // s             # 0 or 1 -> contiguous sublane slice
                p = ph * s + (kw % s)    # static phase-plane index
                patch = x_ref[row, p, pl.ds(dw, out_w), :].astype(jnp.float32)
                for m in range(mult):
                    accs[m] = accs[m] + patch * w_ref[kh, kw, m, :].astype(
                        jnp.float32)
        for m in range(mult):
            o_ref[oh, m, :, :] = (accs[m] + b_ref[m, :].astype(jnp.float32)
                                  ).astype(o_ref.dtype)
        return carry

    lax.fori_loop(0, out_h, row_body, 0)


def fc_kernel(cls_ref, w_ref, b_ref, o_ref):
    """Linear layer: (B, C_in) @ (C_out, C_in)^T + bias (weight untransposed)."""
    o_ref[...] = (lax.dot_general(
        cls_ref[...].astype(jnp.float32), w_ref[...].astype(jnp.float32),
        dimension_numbers=(((1,), (1,)), ((), ())),
        preferred_element_type=jnp.float32)
        + b_ref[...].astype(jnp.float32)).astype(o_ref.dtype)


# ----------------------------------------------------------------------------
# Wrapper (layout glue: single pad + space-to-depth pass, channel tiling)
# ----------------------------------------------------------------------------
def conv_head_pooling_teacher_forward(x, cls_token, params, *, stride):
    conv_w = params["conv_w"]   # (C_out, 1, k, k)   torch Conv2d weight layout
    conv_b = params["conv_b"]   # (C_out,)
    fc_w = params["fc_w"]       # (C_out, C_in)      torch Linear weight layout
    fc_b = params["fc_b"]       # (C_out,)

    B, C_in, H, W = x.shape
    C_out = conv_w.shape[0]
    assert C_out % C_in == 0, "groups=C_in requires C_out to be a multiple"
    mult = C_out // C_in
    k = conv_w.shape[-1]
    s = stride
    pad = s // 2
    out_h = (H + 2 * pad - k) // s + 1
    out_w = (W + 2 * pad - k) // s + 1
    # Phased extents: +1 row/col covers the kh == s / kw == s taps.
    Hq, Wq = out_h + 1, out_w + 1

    # ---- single fused pad + space-to-depth pass (no mult expansion) ----
    x_nhwc = jnp.transpose(x, (0, 2, 3, 1))                    # (B, H, W, C_in)
    x_pad = jnp.pad(
        x_nhwc,
        ((0, 0), (pad, Hq * s - pad - H), (pad, Wq * s - pad - W), (0, 0)))
    # (B, Hq, s, Wq, s, C) -> (B, Hq, ph, pw, Wq, C) -> (B, Hq, s*s, Wq, C)
    x_ph = jnp.transpose(x_pad.reshape(B, Hq, s, Wq, s, C_in),
                         (0, 1, 2, 4, 3, 5)).reshape(B, Hq, s * s, Wq, C_in)

    # weights: torch out-channel co = c_in*mult + m  ->  (k, k, mult, C_in)
    w_kkmc = jnp.transpose(conv_w[:, 0].reshape(C_in, mult, k, k), (2, 3, 1, 0))
    b_mc = conv_b.reshape(C_in, mult).T                         # (mult, C_in)

    # ---- channel tiling: lane-dense blocks, 2nd parallel axis, VMEM bound ----
    if C_in > 128 and C_in % 128 == 0:
        c_tile = 128
    else:
        c_tile = C_in
    n_ct = C_in // c_tile

    conv5 = pl.pallas_call(
        functools.partial(depthwise_conv_kernel, stride=s, ksize=k, mult=mult,
                          out_h=out_h, out_w=out_w),
        out_shape=jax.ShapeDtypeStruct((B, out_h, mult, out_w, C_in), x.dtype),
        grid=(B, n_ct),
        in_specs=[
            pl.BlockSpec((None, Hq, s * s, Wq, c_tile),
                         lambda b, c: (b, 0, 0, 0, c)),
            pl.BlockSpec((k, k, mult, c_tile), lambda b, c: (0, 0, 0, c)),
            pl.BlockSpec((mult, c_tile), lambda b, c: (0, c)),
        ],
        out_specs=pl.BlockSpec((None, out_h, mult, out_w, c_tile),
                               lambda b, c: (b, 0, 0, 0, c)),
        compiler_params=pltpu.CompilerParams(
            dimension_semantics=("parallel", "parallel"),
            vmem_limit_bytes=48 * 1024 * 1024),
    )(x_ph, w_kkmc, b_mc)

    # De-interleave channels: out channel co = c_in * mult + m  (groups=C_in).
    conv_out = jnp.transpose(conv5, (0, 4, 2, 1, 3)).reshape(
        B, C_out, out_h, out_w)

    # ---- fc on cls_token (tiny Pallas matmul, no HBM transpose of fc_w) ----
    cls2d = cls_token.reshape(B, C_in)
    fc_out = pl.pallas_call(
        fc_kernel,
        out_shape=jax.ShapeDtypeStruct((B, C_out), cls_token.dtype),
    )(cls2d, fc_w, fc_b.reshape(1, C_out))
    cls_out = fc_out.reshape(B, 1, C_out)

    return conv_out, cls_out


# ----------------------------------------------------------------------------
# Deterministic parameter init + example run
# ----------------------------------------------------------------------------
def init_params(key, in_feature, out_feature, stride, dtype=jnp.float32):
    k = stride + 1
    k1, k2, k3, k4 = jax.random.split(key, 4)
    # Conv2d(groups=in_feature) weight shape: (out_feature, 1, k, k)
    conv_w = jax.random.normal(k1, (out_feature, 1, k, k), dtype) * 0.1
    conv_b = jax.random.normal(k2, (out_feature,), dtype) * 0.1
    # Linear(in_feature, out_feature) weight shape: (out_feature, in_feature)
    fc_w = jax.random.normal(k3, (out_feature, in_feature), dtype) * 0.1
    fc_b = jax.random.normal(k4, (out_feature,), dtype) * 0.1
    return {"conv_w": conv_w, "conv_b": conv_b, "fc_w": fc_w, "fc_b": fc_b}


if __name__ == "__main__":
    B, C_in, H, W = 2, 4, 16, 16
    C_out = 8            # must be a multiple of C_in (groups=C_in)
    stride = 2           # kernel_size = 3, padding = 1
    dtype = jnp.float32

    root = jax.random.PRNGKey(0)
    kx, kc, kp = jax.random.split(root, 3)
    x = jax.random.normal(kx, (B, C_in, H, W), dtype)
    cls_token = jax.random.normal(kc, (B, 1, C_in), dtype)
    params = init_params(kp, C_in, C_out, stride, dtype)

    conv_out, cls_out = conv_head_pooling_teacher_forward(
        x, cls_token, params, stride=stride)
    jax.block_until_ready((conv_out, cls_out))

    # Pure-JAX reference for sanity checking.
    pad = stride // 2
    ref_conv = jax.lax.conv_general_dilated(
        x, params["conv_w"], window_strides=(stride, stride),
        padding=((pad, pad), (pad, pad)),
        dimension_numbers=("NCHW", "OIHW", "NCHW"),
        feature_group_count=C_in) + params["conv_b"].reshape(1, C_out, 1, 1)
    ref_cls = cls_token @ params["fc_w"].T + params["fc_b"]

    assert conv_out.shape == ref_conv.shape
    assert cls_out.shape == ref_cls.shape
    assert jnp.allclose(conv_out, ref_conv, atol=1e-4, rtol=1e-4)
    assert jnp.allclose(cls_out, ref_cls, atol=1e-4, rtol=1e-4)

    print("KERNEL_OK")
</pallas_src>

<mosaic_0001>
module attributes {stable_mosaic.version = 11 : i64} {
  func.func @depthwise_conv_kernel(%arg0: i32, %arg1: i32, %arg2: memref<1x9x4x9x4xf32, #tpu.memory_space<vmem>>, %arg3: memref<3x3x2x4xf32, #tpu.memory_space<vmem>>, %arg4: memref<2x4xf32, #tpu.memory_space<vmem>>, %arg5: memref<1x8x2x8x4xf32, #tpu.memory_space<vmem>>) attributes {dimension_semantics = [#tpu.dimension_semantics<parallel>, #tpu.dimension_semantics<parallel>], iteration_bounds = array<i64: 2, 1>, scalar_prefetch = 0 : i64, scratch_operands = 0 : i64, tpu.core_type = #tpu.core_type<tc>, window_params = [{transform_indices = @transform_0, window_bounds = array<i64: 1, 9, 4, 9, 4>}, {transform_indices = @transform_1, window_bounds = array<i64: 3, 3, 2, 4>}, {transform_indices = @transform_2, window_bounds = array<i64: 2, 4>}, {transform_indices = @transform_3, window_bounds = array<i64: 1, 8, 2, 8, 4>}]} {
    %c0_i32 = arith.constant 0 : i32
    %c8_i32 = arith.constant 8 : i32
    %0 = arith.addi %c0_i32, %c8_i32 : i32
    %c1_i32 = arith.constant 1 : i32
    scf.for %arg6 = %c0_i32 to %0 step %c1_i32  : i32 {
      %cst = arith.constant 0.000000e+00 : f32
      %1 = vector.broadcast %cst : f32 to vector<8x4xf32>
      %cst_1 = arith.constant 0.000000e+00 : f32
      %2 = vector.broadcast %cst_1 : f32 to vector<8x4xf32>
      %c0_i32_2 = arith.constant 0 : i32
      %3 = arith.addi %arg6, %c0_i32_2 : i32
      %c0 = arith.constant 0 : index
      %4 = arith.index_cast %3 : i32 to index
      %c0_3 = arith.constant 0 : index
      %c0_4 = arith.constant 0 : index
      %c0_5 = arith.constant 0 : index
      %5 = vector.load %arg2[%c0, %4, %c0_3, %c0_4, %c0_5] : memref<1x9x4x9x4xf32, #tpu.memory_space<vmem>>, vector<1x1x1x8x4xf32>
      %6 = vector.shape_cast %5 : vector<1x1x1x8x4xf32> to vector<8x4xf32>
      %c0_6 = arith.constant 0 : index
      %c0_7 = arith.constant 0 : index
      %c0_8 = arith.constant 0 : index
      %c0_9 = arith.constant 0 : index
      %7 = vector.load %arg3[%c0_6, %c0_7, %c0_8, %c0_9] : memref<3x3x2x4xf32, #tpu.memory_space<vmem>>, vector<1x1x1x4xf32>
      %8 = vector.shape_cast %7 : vector<1x1x1x4xf32> to vector<4xf32>
      %9 = vector.shape_cast %8 : vector<4xf32> to vector<1x4xf32>
      %10 = vector.broadcast %9 : vector<1x4xf32> to vector<8x4xf32>
      %11 = arith.mulf %6, %10 : vector<8x4xf32>
      %12 = arith.addf %1, %11 : vector<8x4xf32>
      %c0_10 = arith.constant 0 : index
      %c0_11 = arith.constant 0 : index
      %c1 = arith.constant 1 : index
      %c0_12 = arith.constant 0 : index
      %13 = vector.load %arg3[%c0_10, %c0_11, %c1, %c0_12] : memref<3x3x2x4xf32, #tpu.memory_space<vmem>>, vector<1x1x1x4xf32>
      %14 = vector.shape_cast %13 : vector<1x1x1x4xf32> to vector<4xf32>
      %15 = vector.shape_cast %14 : vector<4xf32> to vector<1x4xf32>
      %16 = vector.broadcast %15 : vector<1x4xf32> to vector<8x4xf32>
      %17 = arith.mulf %6, %16 : vector<8x4xf32>
      %18 = arith.addf %2, %17 : vector<8x4xf32>
      %c0_13 = arith.constant 0 : index
      %19 = arith.index_cast %3 : i32 to index
      %c1_14 = arith.constant 1 : index
      %c0_15 = arith.constant 0 : index
      %c0_16 = arith.constant 0 : index
      %20 = vector.load %arg2[%c0_13, %19, %c1_14, %c0_15, %c0_16] : memref<1x9x4x9x4xf32, #tpu.memory_space<vmem>>, vector<1x1x1x8x4xf32>
      %21 = vector.shape_cast %20 : vector<1x1x1x8x4xf32> to vector<8x4xf32>
      %c0_17 = arith.constant 0 : index
      %c1_18 = arith.constant 1 : index
      %c0_19 = arith.constant 0 : index
      %c0_20 = arith.constant 0 : index
      %22 = vector.load %arg3[%c0_17, %c1_18, %c0_19, %c0_20] : memref<3x3x2x4xf32, #tpu.memory_space<vmem>>, vector<1x1x1x4xf32>
      %23 = vector.shape_cast %22 : vector<1x1x1x4xf32> to vector<4xf32>
      %24 = vector.shape_cast %23 : vector<4xf32> to vector<1x4xf32>
      %25 = vector.broadcast %24 : vector<1x4xf32> to vector<8x4xf32>
      %26 = arith.mulf %21, %25 : vector<8x4xf32>
      %27 = arith.addf %12, %26 : vector<8x4xf32>
      %c0_21 = arith.constant 0 : index
      %c1_22 = arith.constant 1 : index
      %c1_23 = arith.constant 1 : index
      %c0_24 = arith.constant 0 : index
      %28 = vector.load %arg3[%c0_21, %c1_22, %c1_23, %c0_24] : memref<3x3x2x4xf32, #tpu.memory_space<vmem>>, vector<1x1x1x4xf32>
      %29 = vector.shape_cast %28 : vector<1x1x1x4xf32> to vector<4xf32>
      %30 = vector.shape_cast %29 : vector<4xf32> to vector<1x4xf32>
      %31 = vector.broadcast %30 : vector<1x4xf32> to vector<8x4xf32>
      %32 = arith.mulf %21, %31 : vector<8x4xf32>
      %33 = arith.addf %18, %32 : vector<8x4xf32>
      %c0_25 = arith.constant 0 : index
      %34 = arith.index_cast %3 : i32 to index
      %c0_26 = arith.constant 0 : index
      %c1_27 = arith.constant 1 : index
      %c0_28 = arith.constant 0 : index
      %35 = vector.load %arg2[%c0_25, %34, %c0_26, %c1_27, %c0_28] : memref<1x9x4x9x4xf32, #tpu.memory_space<vmem>>, vector<1x1x1x8x4xf32>
      %36 = vector.shape_cast %35 : vector<1x1x1x8x4xf32> to vector<8x4xf32>
      %c0_29 = arith.constant 0 : index
      %c2 = arith.constant 2 : index
      %c0_30 = arith.constant 0 : index
      %c0_31 = arith.constant 0 : index
      %37 = vector.load %arg3[%c0_29, %c2, %c0_30, %c0_31] : memref<3x3x2x4xf32, #tpu.memory_space<vmem>>, vector<1x1x1x4xf32>
      %38 = vector.shape_cast %37 : vector<1x1x1x4xf32> to vector<4xf32>
      %39 = vector.shape_cast %38 : vector<4xf32> to vector<1x4xf32>
      %40 = vector.broadcast %39 : vector<1x4xf32> to vector<8x4xf32>
      %41 = arith.mulf %36, %40 : vector<8x4xf32>
      %42 = arith.addf %27, %41 : vector<8x4xf32>
      %c0_32 = arith.constant 0 : index
      %c2_33 = arith.constant 2 : index
      %c1_34 = arith.constant 1 : index
      %c0_35 = arith.constant 0 : index
      %43 = vector.load %arg3[%c0_32, %c2_33, %c1_34, %c0_35] : memref<3x3x2x4xf32, #tpu.memory_space<vmem>>, vector<1x1x1x4xf32>
      %44 = vector.shape_cast %43 : vector<1x1x1x4xf32> to vector<4xf32>
      %45 = vector.shape_cast %44 : vector<4xf32> to vector<1x4xf32>
      %46 = vector.broadcast %45 : vector<1x4xf32> to vector<8x4xf32>
      %47 = arith.mulf %36, %46 : vector<8x4xf32>
      %48 = arith.addf %33, %47 : vector<8x4xf32>
      %c0_i32_36 = arith.constant 0 : i32
      %49 = arith.addi %arg6, %c0_i32_36 : i32
      %c0_37 = arith.constant 0 : index
      %50 = arith.index_cast %49 : i32 to index
      %c2_38 = arith.constant 2 : index
      %c0_39 = arith.constant 0 : index
      %c0_40 = arith.constant 0 : index
      %51 = vector.load %arg2[%c0_37, %50, %c2_38, %c0_39, %c0_40] : memref<1x9x4x9x4xf32, #tpu.memory_space<vmem>>, vector<1x1x1x8x4xf32>
      %52 = vector.shape_cast %51 : vector<1x1x1x8x4xf32> to vector<8x4xf32>
      %c1_41 = arith.constant 1 : index
      %c0_42 = arith.constant 0 : index
      %c0_43 = arith.constant 0 : index
      %c0_44 = arith.constant 0 : index
      %53 = vector.load %arg3[%c1_41, %c0_42, %c0_43, %c0_44] : memref<3x3x2x4xf32, #tpu.memory_space<vmem>>, vector<1x1x1x4xf32>
      %54 = vector.shape_cast %53 : vector<1x1x1x4xf32> to vector<4xf32>
      %55 = vector.shape_cast %54 : vector<4xf32> to vector<1x4xf32>
      %56 = vector.broadcast %55 : vector<1x4xf32> to vector<8x4xf32>
      %57 = arith.mulf %52, %56 : vector<8x4xf32>
      %58 = arith.addf %42, %57 : vector<8x4xf32>
      %c1_45 = arith.constant 1 : index
      %c0_46 = arith.constant 0 : index
      %c1_47 = arith.constant 1 : index
      %c0_48 = arith.constant 0 : index
      %59 = vector.load %arg3[%c1_45, %c0_46, %c1_47, %c0_48] : memref<3x3x2x4xf32, #tpu.memory_space<vmem>>, vector<1x1x1x4xf32>
      %60 = vector.shape_cast %59 : vector<1x1x1x4xf32> to vector<4xf32>
      %61 = vector.shape_cast %60 : vector<4xf32> to vector<1x4xf32>
      %62 = vector.broadcast %61 : vector<1x4xf32> to vector<8x4xf32>
      %63 = arith.mulf %52, %62 : vector<8x4xf32>
      %64 = arith.addf %48, %63 : vector<8x4xf32>
      %c0_49 = arith.constant 0 : index
      %65 = arith.index_cast %49 : i32 to index
      %c3 = arith.constant 3 : index
      %c0_50 = arith.constant 0 : index
      %c0_51 = arith.constant 0 : index
      %66 = vector.load %arg2[%c0_49, %65, %c3, %c0_50, %c0_51] : memref<1x9x4x9x4xf32, #tpu.memory_space<vmem>>, vector<1x1x1x8x4xf32>
      %67 = vector.shape_cast %66 : vector<1x1x1x8x4xf32> to vector<8x4xf32>
      %c1_52 = arith.constant 1 : index
      %c1_53 = arith.constant 1 : index
      %c0_54 = arith.constant 0 : index
      %c0_55 = arith.constant 0 : index
      %68 = vector.load %arg3[%c1_52, %c1_53, %c0_54, %c0_55] : memref<3x3x2x4xf32, #tpu.memory_space<vmem>>, vector<1x1x1x4xf32>
      %69 = vector.shape_cast %68 : vector<1x1x1x4xf32> to vector<4xf32>
      %70 = vector.shape_cast %69 : vector<4xf32> to vector<1x4xf32>
      %71 = vector.broadcast %70 : vector<1x4xf32> to vector<8x4xf32>
      %72 = arith.mulf %67, %71 : vector<8x4xf32>
      %73 = arith.addf %58, %72 : vector<8x4xf32>
      %c1_56 = arith.constant 1 : index
      %c1_57 = arith.constant 1 : index
      %c1_58 = arith.constant 1 : index
      %c0_59 = arith.constant 0 : index
      %74 = vector.load %arg3[%c1_56, %c1_57, %c1_58, %c0_59] : memref<3x3x2x4xf32, #tpu.memory_space<vmem>>, vector<1x1x1x4xf32>
      %75 = vector.shape_cast %74 : vector<1x1x1x4xf32> to vector<4xf32>
      %76 = vector.shape_cast %75 : vector<4xf32> to vector<1x4xf32>
      %77 = vector.broadcast %76 : vector<1x4xf32> to vector<8x4xf32>
      %78 = arith.mulf %67, %77 : vector<8x4xf32>
      %79 = arith.addf %64, %78 : vector<8x4xf32>
      %c0_60 = arith.constant 0 : index
      %80 = arith.index_cast %49 : i32 to index
      %c2_61 = arith.constant 2 : index
      %c1_62 = arith.constant 1 : index
      %c0_63 = arith.constant 0 : index
      %81 = vector.load %arg2[%c0_60, %80, %c2_61, %c1_62, %c0_63] : memref<1x9x4x9x4xf32, #tpu.memory_space<vmem>>, vector<1x1x1x8x4xf32>
      %82 = vector.shape_cast %81 : vector<1x1x1x8x4xf32> to vector<8x4xf32>
      %c1_64 = arith.constant 1 : index
      %c2_65 = arith.constant 2 : index
      %c0_66 = arith.constant 0 : index
      %c0_67 = arith.constant 0 : index
      %83 = vector.load %arg3[%c1_64, %c2_65, %c0_66, %c0_67] : memref<3x3x2x4xf32, #tpu.memory_space<vmem>>, vector<1x1x1x4xf32>
      %84 = vector.shape_cast %83 : vector<1x1x1x4xf32> to vector<4xf32>
      %85 = vector.shape_cast %84 : vector<4xf32> to vector<1x4xf32>
      %86 = vector.broadcast %85 : vector<1x4xf32> to vector<8x4xf32>
      %87 = arith.mulf %82, %86 : vector<8x4xf32>
      %88 = arith.addf %73, %87 : vector<8x4xf32>
      %c1_68 = arith.constant 1 : index
      %c2_69 = arith.constant 2 : index
      %c1_70 = arith.constant 1 : index
      %c0_71 = arith.constant 0 : index
      %89 = vector.load %arg3[%c1_68, %c2_69, %c1_70, %c0_71] : memref<3x3x2x4xf32, #tpu.memory_space<vmem>>, vector<1x1x1x4xf32>
      %90 = vector.shape_cast %89 : vector<1x1x1x4xf32> to vector<4xf32>
      %91 = vector.shape_cast %90 : vector<4xf32> to vector<1x4xf32>
      %92 = vector.broadcast %91 : vector<1x4xf32> to vector<8x4xf32>
      %93 = arith.mulf %82, %92 : vector<8x4xf32>
      %94 = arith.addf %79, %93 : vector<8x4xf32>
      %c1_i32_72 = arith.constant 1 : i32
      %95 = arith.addi %arg6, %c1_i32_72 : i32
      %c0_73 = arith.constant 0 : index
      %96 = arith.index_cast %95 : i32 to index
      %c0_74 = arith.constant 0 : index
      %c0_75 = arith.constant 0 : index
      %c0_76 = arith.constant 0 : index
      %97 = vector.load %arg2[%c0_73, %96, %c0_74, %c0_75, %c0_76] : memref<1x9x4x9x4xf32, #tpu.memory_space<vmem>>, vector<1x1x1x8x4xf32>
      %98 = vector.shape_cast %97 : vector<1x1x1x8x4xf32> to vector<8x4xf32>
      %c2_77 = arith.constant 2 : index
      %c0_78 = arith.constant 0 : index
      %c0_79 = arith.constant 0 : index
      %c0_80 = arith.constant 0 : index
      %99 = vector.load %arg3[%c2_77, %c0_78, %c0_79, %c0_80] : memref<3x3x2x4xf32, #tpu.memory_space<vmem>>, vector<1x1x1x4xf32>
      %100 = vector.shape_cast %99 : vector<1x1x1x4xf32> to vector<4xf32>
      %101 = vector.shape_cast %100 : vector<4xf32> to vector<1x4xf32>
      %102 = vector.broadcast %101 : vector<1x4xf32> to vector<8x4xf32>
      %103 = arith.mulf %98, %102 : vector<8x4xf32>
      %104 = arith.addf %88, %103 : vector<8x4xf32>
      %c2_81 = arith.constant 2 : index
      %c0_82 = arith.constant 0 : index
      %c1_83 = arith.constant 1 : index
      %c0_84 = arith.constant 0 : index
      %105 = vector.load %arg3[%c2_81, %c0_82, %c1_83, %c0_84] : memref<3x3x2x4xf32, #tpu.memory_space<vmem>>, vector<1x1x1x4xf32>
      %106 = vector.shape_cast %105 : vector<1x1x1x4xf32> to vector<4xf32>
      %107 = vector.shape_cast %106 : vector<4xf32> to vector<1x4xf32>
      %108 = vector.broadcast %107 : vector<1x4xf32> to vector<8x4xf32>
      %109 = arith.mulf %98, %108 : vector<8x4xf32>
      %110 = arith.addf %94, %109 : vector<8x4xf32>
      %c0_85 = arith.constant 0 : index
      %111 = arith.index_cast %95 : i32 to index
      %c1_86 = arith.constant 1 : index
      %c0_87 = arith.constant 0 : index
      %c0_88 = arith.constant 0 : index
      %112 = vector.load %arg2[%c0_85, %111, %c1_86, %c0_87, %c0_88] : memref<1x9x4x9x4xf32, #tpu.memory_space<vmem>>, vector<1x1x1x8x4xf32>
      %113 = vector.shape_cast %112 : vector<1x1x1x8x4xf32> to vector<8x4xf32>
      %c2_89 = arith.constant 2 : index
      %c1_90 = arith.constant 1 : index
      %c0_91 = arith.constant 0 : index
      %c0_92 = arith.constant 0 : index
      %114 = vector.load %arg3[%c2_89, %c1_90, %c0_91, %c0_92] : memref<3x3x2x4xf32, #tpu.memory_space<vmem>>, vector<1x1x1x4xf32>
      %115 = vector.shape_cast %114 : vector<1x1x1x4xf32> to vector<4xf32>
      %116 = vector.shape_cast %115 : vector<4xf32> to vector<1x4xf32>
      %117 = vector.broadcast %116 : vector<1x4xf32> to vector<8x4xf32>
      %118 = arith.mulf %113, %117 : vector<8x4xf32>
      %119 = arith.addf %104, %118 : vector<8x4xf32>
      %c2_93 = arith.constant 2 : index
      %c1_94 = arith.constant 1 : index
      %c1_95 = arith.constant 1 : index
      %c0_96 = arith.constant 0 : index
      %120 = vector.load %arg3[%c2_93, %c1_94, %c1_95, %c0_96] : memref<3x3x2x4xf32, #tpu.memory_space<vmem>>, vector<1x1x1x4xf32>
      %121 = vector.shape_cast %120 : vector<1x1x1x4xf32> to vector<4xf32>
      %122 = vector.shape_cast %121 : vector<4xf32> to vector<1x4xf32>
      %123 = vector.broadcast %122 : vector<1x4xf32> to vector<8x4xf32>
      %124 = arith.mulf %113, %123 : vector<8x4xf32>
      %125 = arith.addf %110, %124 : vector<8x4xf32>
      %c0_97 = arith.constant 0 : index
      %126 = arith.index_cast %95 : i32 to index
      %c0_98 = arith.constant 0 : index
      %c1_99 = arith.constant 1 : index
      %c0_100 = arith.constant 0 : index
      %127 = vector.load %arg2[%c0_97, %126, %c0_98, %c1_99, %c0_100] : memref<1x9x4x9x4xf32, #tpu.memory_space<vmem>>, vector<1x1x1x8x4xf32>
      %128 = vector.shape_cast %127 : vector<1x1x1x8x4xf32> to vector<8x4xf32>
      %c2_101 = arith.constant 2 : index
      %c2_102 = arith.constant 2 : index
      %c0_103 = arith.constant 0 : index
      %c0_104 = arith.constant 0 : index
      %129 = vector.load %arg3[%c2_101, %c2_102, %c0_103, %c0_104] : memref<3x3x2x4xf32, #tpu.memory_space<vmem>>, vector<1x1x1x4xf32>
      %130 = vector.shape_cast %129 : vector<1x1x1x4xf32> to vector<4xf32>
      %131 = vector.shape_cast %130 : vector<4xf32> to vector<1x4xf32>
      %132 = vector.broadcast %131 : vector<1x4xf32> to vector<8x4xf32>
      %133 = arith.mulf %128, %132 : vector<8x4xf32>
      %134 = arith.addf %119, %133 : vector<8x4xf32>
      %c2_105 = arith.constant 2 : index
      %c2_106 = arith.constant 2 : index
      %c1_107 = arith.constant 1 : index
      %c0_108 = arith.constant 0 : index
      %135 = vector.load %arg3[%c2_105, %c2_106, %c1_107, %c0_108] : memref<3x3x2x4xf32, #tpu.memory_space<vmem>>, vector<1x1x1x4xf32>
      %136 = vector.shape_cast %135 : vector<1x1x1x4xf32> to vector<4xf32>
      %137 = vector.shape_cast %136 : vector<4xf32> to vector<1x4xf32>
      %138 = vector.broadcast %137 : vector<1x4xf32> to vector<8x4xf32>
      %139 = arith.mulf %128, %138 : vector<8x4xf32>
      %140 = arith.addf %125, %139 : vector<8x4xf32>
      %c0_109 = arith.constant 0 : index
      %c0_110 = arith.constant 0 : index
      %141 = vector.load %arg4[%c0_109, %c0_110] : memref<2x4xf32, #tpu.memory_space<vmem>>, vector<1x4xf32>
      %142 = vector.shape_cast %141 : vector<1x4xf32> to vector<4xf32>
      %143 = vector.shape_cast %142 : vector<4xf32> to vector<1x4xf32>
      %144 = vector.broadcast %143 : vector<1x4xf32> to vector<8x4xf32>
      %145 = arith.addf %134, %144 : vector<8x4xf32>
      %c0_111 = arith.constant 0 : index
      %146 = arith.index_cast %arg6 : i32 to index
      %c0_112 = arith.constant 0 : index
      %c0_113 = arith.constant 0 : index
      %c0_114 = arith.constant 0 : index
      %147 = vector.load %arg5[%c0_111, %146, %c0_112, %c0_113, %c0_114] : memref<1x8x2x8x4xf32, #tpu.memory_space<vmem>>, vector<1x1x1x8x4xf32>
      %148 = vector.shape_cast %147 : vector<1x1x1x8x4xf32> to vector<8x4xf32>
      %149 = vector.shape_cast %145 : vector<8x4xf32> to vector<1x1x1x8x4xf32>
      tpu.vector_store %arg5[%c0_111, %146, %c0_112, %c0_113, %c0_114], %149 {strides = array<i32>} : memref<1x8x2x8x4xf32, #tpu.memory_space<vmem>>, vector<1x1x1x8x4xf32>,
      %c1_115 = arith.constant 1 : index
      %c0_116 = arith.constant 0 : index
      %150 = vector.load %arg4[%c1_115, %c0_116] : memref<2x4xf32, #tpu.memory_space<vmem>>, vector<1x4xf32>
      %151 = vector.shape_cast %150 : vector<1x4xf32> to vector<4xf32>
      %152 = vector.shape_cast %151 : vector<4xf32> to vector<1x4xf32>
      %153 = vector.broadcast %152 : vector<1x4xf32> to vector<8x4xf32>
      %154 = arith.addf %140, %153 : vector<8x4xf32>
      %c0_117 = arith.constant 0 : index
      %155 = arith.index_cast %arg6 : i32 to index
      %c1_118 = arith.constant 1 : index
      %c0_119 = arith.constant 0 : index
      %c0_120 = arith.constant 0 : index
      %156 = vector.load %arg5[%c0_117, %155, %c1_118, %c0_119, %c0_120] : memref<1x8x2x8x4xf32, #tpu.memory_space<vmem>>, vector<1x1x1x8x4xf32>
      %157 = vector.shape_cast %156 : vector<1x1x1x8x4xf32> to vector<8x4xf32>
      %158 = vector.shape_cast %154 : vector<8x4xf32> to vector<1x1x1x8x4xf32>
      tpu.vector_store %arg5[%c0_117, %155, %c1_118, %c0_119, %c0_120], %158 {strides = array<i32>} : memref<1x8x2x8x4xf32, #tpu.memory_space<vmem>>, vector<1x1x1x8x4xf32>,
    }
    %c8_i32_0 = arith.constant 8 : i32
    return
  }
  func.func @transform_0(%arg0: i32, %arg1: i32) -> (i32, i32, i32, i32, i32) {
    %c0_i32 = arith.constant 0 : i32
    %c0_i32_0 = arith.constant 0 : i32
    %c0_i32_1 = arith.constant 0 : i32
    %c0_i32_2 = arith.constant 0 : i32
    return %arg0, %c0_i32, %c0_i32_0, %c0_i32_1, %arg1 : i32, i32, i32, i32, i32
  }
  func.func @transform_1(%arg0: i32, %arg1: i32) -> (i32, i32, i32, i32) {
    %c0_i32 = arith.constant 0 : i32
    %c0_i32_0 = arith.constant 0 : i32
    %c0_i32_1 = arith.constant 0 : i32
    %c0_i32_2 = arith.constant 0 : i32
    return %c0_i32, %c0_i32_0, %c0_i32_1, %arg1 : i32, i32, i32, i32
  }
  func.func @transform_2(%arg0: i32, %arg1: i32) -> (i32, i32) {
    %c0_i32 = arith.constant 0 : i32
    %c0_i32_0 = arith.constant 0 : i32
    return %c0_i32, %arg1 : i32, i32
  }
  func.func @transform_3(%arg0: i32, %arg1: i32) -> (i32, i32, i32, i32, i32) {
    %c0_i32 = arith.constant 0 : i32
    %c0_i32_0 = arith.constant 0 : i32
    %c0_i32_1 = arith.constant 0 : i32
    %c0_i32_2 = arith.constant 0 : i32
    return %arg0, %c0_i32, %c0_i32_0, %c0_i32_1, %arg1 : i32, i32, i32, i32, i32
  }
}

</mosaic_0001>

<llo_original>
// kernel: tpu_custom_call.1
$region0: #{tpu_custom_call.1}
  #allocation0 [shape = 'u32[]', space=smem, size = 0x4, offset = 0x4, fixed_abs, tag = 'smem constant byte address 0x4 - core index']
  #allocation1 [shape = 'u32[144,128]{1,0:T(1,128)}', space=vmem, size = 0x12000, scoped, tag = 'internal scratch']
  %s0 = inlined_call_operand.vmem [shape: f32[2,9,4,9,4], index: 0, kind: input, shape index: {}]
  %s1 = inlined_call_operand.vmem [shape: f32[3,3,2,4], index: 1, kind: input, shape index: {}]
  %s2 = inlined_call_operand.vmem [shape: f32[2,4], index: 2, kind: input, shape index: {}]
  %s3 = inlined_call_operand.vmem [shape: f32[2,8,2,8,4], index: 3, kind: output, shape index: {}]
  %s4 = sld [smem:[#allocation0]]
  $region52: #{tpu_custom_call.1} parent=0
    _
  %s6 = ssub.s32 1, %s4
  %s7 = scalar_select 0, %s6, %s4
  loop: start=0, step=1, limit=4
  $region2: #{tpu_custom_call.1} parent=0 // loop_pre_header
    _
  $region3: #{tpu_custom_call.1} parent=0 // loop_header
    %s9 = sphi 0, %s13
    %p10 = scmp.ge.s32.totalorder %s9, 4
    %s16 = sphi 0, %s28
    %s17 = sphi 0, %s24
    %s18 = sphi 0, %s16
    %s19 = sphi 0, %s17
    %s20 = sphi 0, %s18
    %s21 = sphi 0, %s19
    %s33 = sphi 0, %s35
    %s36 = sphi 0, %s33
    %s37 = sphi 0, %s36
    %s53 = sphi 0, %s37
    %s59 = sphi 0, %s61
    %s62 = sphi 0, %s59
    %s63 = sphi 0, %s62
    %s79 = sphi 0, %s63
    %s85 = sphi 0, %s87
    %s88 = sphi 0, %s85
    %s89 = sphi 0, %s88
    %s105 = sphi 0, %s89
    %s113 = sphi 0, %s115
    %s116 = sphi 0, %s113
    %s117 = sphi 0, %s116
    %s133 = sphi 0, %s117
  $region4: #{tpu_custom_call.1} parent=0 // loop_header_branch
    %12 = sbr.rel (%p10) target = $region8
  $region5: #{tpu_custom_call.1} parent=0 // loop_body
    %s14 = ssub.s32 %s9, 1
    %s15 = ssub.s32 %s9, 2
    %s22 = sadd.s32 1, %s17
    %p23 = scmp.ge.s32.totalorder %s22, 1
    %s24 = scalar_select %p23, 0, %s22
    %s25 = sadd.s32 1, %s16
    %s26 = scalar_select %p23, %s25, %s16
    %p27 = scmp.ge.s32.totalorder %s26, 2
    %s28 = scalar_select %p27, 0, %s26
    %s29 = ssub.s32 %s16, %s28
    %s30 = ssub.s32 %s17, %s24
    %s31 = sor.u32 %s29, %s30
    %p32 = scmp.eq.s32.totalorder %s31, 0
    %s34 = sadd.s32 %s33, 1
    %s35 = scalar_select %p32, %s33, %s34
    %p38 = pneg %p32
    %p39 = scmp.eq.s32.totalorder %s9, 1
    %p40 = por %p38, %p39
    %p41 = scmp.ne.s32.totalorder %s33, %s36
    %p42 = scmp.eq.s32.totalorder %s9, 0
    %p43 = por %p41, %p42
    %p44 = scmp.ne.s32.totalorder %s33, %s36
    %p45 = scmp.eq.s32.totalorder %s14, 1
    %p46 = por %p44, %p45
    %p47 = scmp.ne.s32.totalorder %s36, %s37
    %p48 = scmp.eq.s32.totalorder %s14, 0
    %p49 = por %p47, %p48
    %p50 = scmp.ne.s32.totalorder %s36, %s37
    %p51 = scmp.eq.s32.totalorder %s15, 1
    %p52 = por %p50, %p51
    %p54 = scmp.ne.s32.totalorder %s37, %s53
    %p55 = scmp.eq.s32.totalorder %s15, 0
    %p56 = por %p54, %p55
    %s57 = ssub.s32 %s17, %s24
    %p58 = scmp.eq.s32.totalorder %s57, 0
    %s60 = sadd.s32 %s59, 1
    %s61 = scalar_select %p58, %s59, %s60
    %p64 = pneg %p58
    %p65 = scmp.eq.s32.totalorder %s9, 1
    %p66 = por %p64, %p65
    %p67 = scmp.ne.s32.totalorder %s59, %s62
    %p68 = scmp.eq.s32.totalorder %s9, 0
    %p69 = por %p67, %p68
    %p70 = scmp.ne.s32.totalorder %s59, %s62
    %p71 = scmp.eq.s32.totalorder %s14, 1
    %p72 = por %p70, %p71
    %p73 = scmp.ne.s32.totalorder %s62, %s63
    %p74 = scmp.eq.s32.totalorder %s14, 0
    %p75 = por %p73, %p74
    %p76 = scmp.ne.s32.totalorder %s62, %s63
    %p77 = scmp.eq.s32.totalorder %s15, 1
    %p78 = por %p76, %p77
    %p80 = scmp.ne.s32.totalorder %s63, %s79
    %p81 = scmp.eq.s32.totalorder %s15, 0
    %p82 = por %p80, %p81
    %s83 = ssub.s32 %s17, %s24
    %p84 = scmp.eq.s32.totalorder %s83, 0
    %s86 = sadd.s32 %s85, 1
    %s87 = scalar_select %p84, %s85, %s86
    %p90 = pneg %p84
    %p91 = scmp.eq.s32.totalorder %s9, 1
    %p92 = por %p90, %p91
    %p93 = scmp.ne.s32.totalorder %s85, %s88
    %p94 = scmp.eq.s32.totalorder %s9, 0
    %p95 = por %p93, %p94
    %p96 = scmp.ne.s32.totalorder %s85, %s88
    %p97 = scmp.eq.s32.totalorder %s14, 1
    %p98 = por %p96, %p97
    %p99 = scmp.ne.s32.totalorder %s88, %s89
    %p100 = scmp.eq.s32.totalorder %s14, 0
    %p101 = por %p99, %p100
    %p102 = scmp.ne.s32.totalorder %s88, %s89
    %p103 = scmp.eq.s32.totalorder %s15, 1
    %p104 = por %p102, %p103
    %p106 = scmp.ne.s32.totalorder %s89, %s105
    %p107 = scmp.eq.s32.totalorder %s15, 0
    %p108 = por %p106, %p107
    %s109 = ssub.s32 %s16, %s28
    %s110 = ssub.s32 %s17, %s24
    %s111 = sor.u32 %s109, %s110
    %p112 = scmp.eq.s32.totalorder %s111, 0
    %s114 = sadd.s32 %s113, 1
    %s115 = scalar_select %p112, %s113, %s114
    %p118 = pneg %p112
    %p119 = scmp.eq.s32.totalorder %s9, 1
    %p120 = por %p118, %p119
    %p121 = scmp.ne.s32.totalorder %s113, %s116
    %p122 = scmp.eq.s32.totalorder %s9, 0
    %p123 = por %p121, %p122
    %p124 = scmp.ne.s32.totalorder %s113, %s116
    %p125 = scmp.eq.s32.totalorder %s14, 1
    %p126 = por %p124, %p125
    %p127 = scmp.ne.s32.totalorder %s116, %s117
    %p128 = scmp.eq.s32.totalorder %s14, 0
    %p129 = por %p127, %p128
    %p130 = scmp.ne.s32.totalorder %s116, %s117
    %p131 = scmp.eq.s32.totalorder %s15, 1
    %p132 = por %p130, %p131
    %p134 = scmp.ne.s32.totalorder %s117, %s133
    %p135 = scmp.eq.s32.totalorder %s15, 0
    %p136 = por %p134, %p135
    %p137 = scmp.le.s32.totalorder 1, %s9
    %p138 = scmp.lt.s32.totalorder %s9, 3
    %p139 = pnand %p137, %p138
    %p140 = pneg %p139
    // Predicated region
    $region9: #{tpu_custom_call.1} parent=5 // pred_check
      _
    $region10: #{tpu_custom_call.1} parent=5 // pred_check_branch
      %142 = sbr.rel (%p139) target = $region12
    $region11: #{tpu_custom_call.1} parent=5 // pred_region
      %s143 = ssub.s32 %s9, 1
      // Predicated region
      $region13: #{tpu_custom_call.1} parent=11 // pred_check
        %p144 = pneg %p75
      $region14: #{tpu_custom_call.1} parent=11 // pred_check_branch
        %146 = sbr.rel (%p144) target = $region16
      $region15: #{tpu_custom_call.1} parent=11 // pred_region
        %p147 = scmp.lt.s32.totalorder %s19, 0
        %s148 = scalar_select %p147, %s19, 0
        %s149 = smul.addr %s148, 2
        %s150 = scalar_lea.vmem %s1, %s149
      $region16: #{tpu_custom_call.1} parent=11 // pred_fallthru
        _
      // Predicated region
      $region17: #{tpu_custom_call.1} parent=11 // pred_check
        %p151 = pneg %p101
      $region18: #{tpu_custom_call.1} parent=11 // pred_check_branch
        %153 = sbr.rel (%p151) target = $region20
      $region19: #{tpu_custom_call.1} parent=11 // pred_region
        %p154 = scmp.lt.s32.totalorder %s19, 0
        %s155 = scalar_select %p154, %s19, 0
        %s156 = smul.addr %s155, 2
        %s157 = scalar_lea.vmem %s2, %s156
      $region20: #{tpu_custom_call.1} parent=11 // pred_fallthru
        _
    $region12: #{tpu_custom_call.1} parent=5 // pred_fallthru
      _
    %p158 = scmp.lt.s32.totalorder %s9, 2
    // Predicated region
    $region21: #{tpu_custom_call.1} parent=5 // pred_check
      %p159 = pneg %p158
    $region22: #{tpu_custom_call.1} parent=5 // pred_check_branch
      %161 = sbr.rel (%p159) target = $region24
    $region23: #{tpu_custom_call.1} parent=5 // pred_region
      // Predicated region
      $region25: #{tpu_custom_call.1} parent=23 // pred_check
        %p162 = pneg %p43
      $region26: #{tpu_custom_call.1} parent=23 // pred_check_branch
        %164 = sbr.rel (%p162) target = $region28
      $region27: #{tpu_custom_call.1} parent=23 // pred_region
        %p165 = scmp.lt.s32.totalorder %s16, 1
        %s166 = scalar_select %p165, %s16, 1
        %p167 = scmp.lt.s32.totalorder %s17, 0
        %s168 = scalar_select %p167, %s17, 0
        %s169 = smul.addr %s166, 72
        %s170 = sadd.s32 %s168, %s169
        %s171 = smul.addr %s170, 8
        %s172 = scalar_lea.vmem %s0, %s171
      $region28: #{tpu_custom_call.1} parent=23 // pred_fallthru
        _
    $region24: #{tpu_custom_call.1} parent=5 // pred_fallthru
      _
    %p173 = scmp.le.s32.totalorder 1, %s9
    %p174 = scmp.lt.s32.totalorder %s9, 3
    %p175 = pnand %p173, %p174
    %p176 = pneg %p175
    // Predicated region
    $region29: #{tpu_custom_call.1} parent=5 // pred_check
      _
    $region30: #{tpu_custom_call.1} parent=5 // pred_check_branch
      %178 = sbr.rel (%p175) target = $region32
    $region31: #{tpu_custom_call.1} parent=5 // pred_region
      %s179 = ssub.s32 %s9, 1
      %p180 = scmp.lt.s32.totalorder %s18, 1
      %s181 = scalar_select %p180, %s18, 1
      %p182 = scmp.lt.s32.totalorder %s19, 0
      %s183 = scalar_select %p182, %s19, 0
      %s184 = smul.addr %s181, 72
      %s185 = sadd.s32 %s183, %s184
      %s186 = smul.addr %s185, 8
      %s187 = scalar_lea.vmem %s0, %s186
      %p188 = pneg %p49
      %p189 = pneg %p46
      %p190 = scmp.lt.s32.totalorder %s19, 0
      %s191 = scalar_select %p190, %s19, 0
      %s192 = smul.addr %s191, 2
      %s193 = scalar_lea.vmem %s1, %s192
      %p194 = pneg %p75
      %p195 = pneg %p72
      %p196 = scmp.lt.s32.totalorder %s19, 0
      %s197 = scalar_select %p196, %s19, 0
      %s198 = smul.addr %s197, 2
      %s199 = scalar_lea.vmem %s2, %s198
      %p200 = pneg %p101
      %p201 = pneg %p98
      %p202 = pneg %p129
      %p203 = pneg %p126
      %p204 = scmp.lt.s32.totalorder %s18, 1
      %s205 = scalar_select %p204, %s18, 1
      %p206 = scmp.lt.s32.totalorder %s19, 0
      %s207 = scalar_select %p206, %s19, 0
      %s208 = smul.addr %s205, 16
      %s209 = sadd.s32 %s207, %s208
      %s210 = smul.addr %s209, 8
      %s211 = scalar_lea.vmem %s3, %s210
      %p212 = scmp.lt.s32.totalorder %s18, 1
      %s213 = scalar_select %p212, %s18, 1
      %p214 = scmp.lt.s32.totalorder %s19, 0
      %s215 = scalar_select %p214, %s19, 0
      %s216 = smul.addr %s213, 72
      %s217 = sadd.s32 %s215, %s216
      %s218 = smul.addr %s217, 8
      %s219 = scalar_lea.vmem %s0, %s218
      %p220 = scmp.lt.s32.totalorder %s19, 0
      %s221 = scalar_select %p220, %s19, 0
      %s222 = smul.addr %s221, 2
      %s223 = scalar_lea.vmem %s1, %s222
      %p224 = scmp.lt.s32.totalorder %s19, 0
      %s225 = scalar_select %p224, %s19, 0
      %s226 = smul.addr %s225, 2
      %s227 = scalar_lea.vmem %s2, %s226
      %p228 = scmp.lt.s32.totalorder %s18, 1
      %s229 = scalar_select %p228, %s18, 1
      %p230 = scmp.lt.s32.totalorder %s19, 0
      %s231 = scalar_select %p230, %s19, 0
      %s232 = smul.addr %s229, 16
      %s233 = sadd.s32 %s231, %s232
      %s234 = smul.addr %s233, 8
      %s235 = scalar_lea.vmem %s3, %s234
      loop: start=0, step=1, limit=8
      $region33: #{tpu_custom_call.1} parent=31 // loop_pre_header
        _
      $region34: #{tpu_custom_call.1} parent=31 // loop_header
        %s237 = sphi 0, %s241
        %p238 = scmp.ge.s32.totalorder %s237, 8
      $region35: #{tpu_custom_call.1} parent=31 // loop_header_branch
        %240 = sbr.rel (%p238) target = $region39
      $region36: #{tpu_custom_call.1} parent=31 // loop_body
        %s242 = smul.u32 %s237, 64
        %s243 = scalar_lea.vmem %s219, %s242
        %v244 = vld [vmem:[%s243] sm:$0xff]
        %v245 = vld [vmem:[%s223] sm:$0x1]
        %v246 = vlaneseq
        %v247 = vshrl.u32 %v246, 7
        %v248 = vsub.s32 0, %v247
        %v249 = vrot.slane %v245, %v248
        %v250 = vmul.f32 %v244, %v249
        %v251 = vadd.f32 %v250, 0.0
        %v252 = vld [vmem:[%s223 + $0x1] sm:$0x1]
        %v253 = vlaneseq
        %v254 = vshrl.u32 %v253, 7
        %v255 = vsub.s32 0, %v254
        %v256 = vrot.slane %v252, %v255
        %v257 = vmul.f32 %v244, %v256
        %v258 = vadd.f32 %v257, 0.0
        %s259 = sadd.s32 16, %s242
        %s260 = scalar_lea.vmem %s219, %s259
        %v261 = vld [vmem:[%s260] sm:$0xff]
        %s262 = scalar_lea.vmem %s223, 2
        %v263 = vld [vmem:[%s262] sm:$0x1]
        %v264 = vlaneseq
        %v265 = vshrl.u32 %v264, 7
        %v266 = vsub.s32 0, %v265
        %v267 = vrot.slane %v263, %v266
        %v268 = vmul.f32 %v261, %v267
        %v269 = vadd.f32 %v251, %v268
        %v270 = vld [vmem:[%s262 + $0x1] sm:$0x1]
        %v271 = vlaneseq
        %v272 = vshrl.u32 %v271, 7
        %v273 = vsub.s32 0, %v272
        %v274 = vrot.slane %v270, %v273
        %v275 = vmul.f32 %v261, %v274
        %v276 = vadd.f32 %v258, %v275
        %v277 = vld [vmem:[%s243 + $0x1] sm:$0xff]
        %s278 = scalar_lea.vmem %s223, 4
        %v279 = vld [vmem:[%s278] sm:$0x1]
        %v280 = vlaneseq
        %v281 = vshrl.u32 %v280, 7
        %v282 = vsub.s32 0, %v281
        %v283 = vrot.slane %v279, %v282
        %v284 = vmul.f32 %v277, %v283
        %v285 = vadd.f32 %v269, %v284
        %v286 = vld [vmem:[%s278 + $0x1] sm:$0x1]
        %v287 = vlaneseq
        %v288 = vshrl.u32 %v287, 7
        %v289 = vsub.s32 0, %v288
        %v290 = vrot.slane %v286, %v289
        %v291 = vmul.f32 %v277, %v290
        %v292 = vadd.f32 %v276, %v291
        %s293 = sadd.s32 32, %s242
        %s294 = scalar_lea.vmem %s219, %s293
        %v295 = vld [vmem:[%s294] sm:$0xff]
        %s296 = scalar_lea.vmem %s223, 6
        %v297 = vld [vmem:[%s296] sm:$0x1]
        %v298 = vlaneseq
        %v299 = vshrl.u32 %v298, 7
        %v300 = vsub.s32 0, %v299
        %v301 = vrot.slane %v297, %v300
        %v302 = vmul.f32 %v295, %v301
        %v303 = vadd.f32 %v285, %v302
        %v304 = vld [vmem:[%s296 + $0x1] sm:$0x1]
        %v305 = vlaneseq
        %v306 = vshrl.u32 %v305, 7
        %v307 = vsub.s32 0, %v306
        %v308 = vrot.slane %v304, %v307
        %v309 = vmul.f32 %v295, %v308
        %v310 = vadd.f32 %v292, %v309
        %s311 = sadd.s32 48, %s242
        %s312 = scalar_lea.vmem %s219, %s311
        %v313 = vld [vmem:[%s312] sm:$0xff]
        %s314 = scalar_lea.vmem %s223, 8
        %v315 = vld [vmem:[%s314] sm:$0x1]
        %v316 = vlaneseq
        %v317 = vshrl.u32 %v316, 7
        %v318 = vsub.s32 0, %v317
        %v319 = vrot.slane %v315, %v318
        %v320 = vmul.f32 %v313, %v319
        %v321 = vadd.f32 %v303, %v320
        %v322 = vld [vmem:[%s314 + $0x1] sm:$0x1]
        %v323 = vlaneseq
        %v324 = vshrl.u32 %v323, 7
        %v325 = vsub.s32 0, %v324
        %v326 = vrot.slane %v322, %v325
        %v327 = vmul.f32 %v313, %v326
        %v328 = vadd.f32 %v310, %v327
        %v329 = vld [vmem:[%s294 + $0x1] sm:$0xff]
        %s330 = scalar_lea.vmem %s223, 10
        %v331 = vld [vmem:[%s330] sm:$0x1]
        %v332 = vlaneseq
        %v333 = vshrl.u32 %v332, 7
        %v334 = vsub.s32 0, %v333
        %v335 = vrot.slane %v331, %v334
        %v336 = vmul.f32 %v329, %v335
        %v337 = vadd.f32 %v321, %v336
        %v338 = vld [vmem:[%s330 + $0x1] sm:$0x1]
        %v339 = vlaneseq
        %v340 = vshrl.u32 %v339, 7
        %v341 = vsub.s32 0, %v340
        %v342 = vrot.slane %v338, %v341
        %v343 = vmul.f32 %v329, %v342
        %v344 = vadd.f32 %v328, %v343
        %s345 = sadd.s32 %s237, 1
        %s346 = smul.u32 %s345, 64
        %s347 = scalar_lea.vmem %s219, %s346
        %v348 = vld [vmem:[%s347] sm:$0xff]
        %s349 = scalar_lea.vmem %s223, 12
        %v350 = vld [vmem:[%s349] sm:$0x1]
        %v351 = vlaneseq
        %v352 = vshrl.u32 %v351, 7
        %v353 = vsub.s32 0, %v352
        %v354 = vrot.slane %v350, %v353
        %v355 = vmul.f32 %v348, %v354
        %v356 = vadd.f32 %v337, %v355
        %v357 = vld [vmem:[%s349 + $0x1] sm:$0x1]
        %v358 = vlaneseq
        %v359 = vshrl.u32 %v358, 7
        %v360 = vsub.s32 0, %v359
        %v361 = vrot.slane %v357, %v360
        %v362 = vmul.f32 %v348, %v361
        %v363 = vadd.f32 %v344, %v362
        %s364 = sadd.s32 16, %s346
        %s365 = scalar_lea.vmem %s219, %s364
        %v366 = vld [vmem:[%s365] sm:$0xff]
        %s367 = scalar_lea.vmem %s223, 14
        %v368 = vld [vmem:[%s367] sm:$0x1]
        %v369 = vlaneseq
        %v370 = vshrl.u32 %v369, 7
        %v371 = vsub.s32 0, %v370
        %v372 = vrot.slane %v368, %v371
        %v373 = vmul.f32 %v366, %v372
        %v374 = vadd.f32 %v356, %v373
        %v375 = vld [vmem:[%s367 + $0x1] sm:$0x1]
        %v376 = vlaneseq
        %v377 = vshrl.u32 %v376, 7
        %v378 = vsub.s32 0, %v377
        %v379 = vrot.slane %v375, %v378
        %v380 = vmul.f32 %v366, %v379
        %v381 = vadd.f32 %v363, %v380
        %v382 = vld [vmem:[%s347 + $0x1] sm:$0xff]
        %s383 = scalar_lea.vmem %s223, 16
        %v384 = vld [vmem:[%s383] sm:$0x1]
        %v385 = vlaneseq
        %v386 = vshrl.u32 %v385, 7
        %v387 = vsub.s32 0, %v386
        %v388 = vrot.slane %v384, %v387
        %v389 = vmul.f32 %v382, %v388
        %v390 = vadd.f32 %v374, %v389
        %v391 = vld [vmem:[%s383 + $0x1] sm:$0x1]
        %v392 = vlaneseq
        %v393 = vshrl.u32 %v392, 7
        %v394 = vsub.s32 0, %v393
        %v395 = vrot.slane %v391, %v394
        %v396 = vmul.f32 %v382, %v395
        %v397 = vadd.f32 %v381, %v396
        %v398 = vld [vmem:[%s227] sm:$0x1]
        %v399 = vlaneseq
        %v400 = vshrl.u32 %v399, 7
        %v401 = vsub.s32 0, %v400
        %v402 = vrot.slane %v398, %v401
        %v403 = vadd.f32 %v390, %v402
        %s404 = smul.u32 %s237, 16
        %s405 = scalar_lea.vmem %s235, %s404
        %vm406 = vcmask 31744
        %407 = vst.msk [vmem:[%s405] sm:$0xff] %vm406, %v403
        %v408 = vld [vmem:[%s227 + $0x1] sm:$0x1]
        %v409 = vlaneseq
        %v410 = vshrl.u32 %v409, 7
        %v411 = vsub.s32 0, %v410
        %v412 = vrot.slane %v408, %v411
        %v413 = vadd.f32 %v397, %v412
        %s414 = sadd.s32 8, %s404
        %s415 = scalar_lea.vmem %s235, %s414
        %416 = vst.msk [vmem:[%s415] sm:$0xff] %vm406, %v413
      $region37: #{tpu_custom_call.1} parent=31 // loop_footer
        %s241 = sadd.s32 1, %s237
      $region38: #{tpu_custom_call.1} parent=31 // loop_footer_branch
        %236 = sbr.rel target = $region34
      $region39: #{tpu_custom_call.1} parent=31 // loop_exit
        _
      %p417 = scmp.lt.s32.totalorder %s18, 1
      %s418 = scalar_select %p417, %s18, 1
      %p419 = scmp.lt.s32.totalorder %s19, 0
      %s420 = scalar_select %p419, %s19, 0
      %s421 = smul.addr %s418, 16
      %s422 = sadd.s32 %s420, %s421
      %s423 = smul.addr %s422, 8
      %s424 = scalar_lea.vmem %s3, %s423
      // Predicated region
      $region40: #{tpu_custom_call.1} parent=31 // pred_check
        %p425 = pneg %p126
      $region41: #{tpu_custom_call.1} parent=31 // pred_check_branch
        %427 = sbr.rel (%p425) target = $region43
      $region42: #{tpu_custom_call.1} parent=31 // pred_region
        _
      $region43: #{tpu_custom_call.1} parent=31 // pred_fallthru
        _
    $region32: #{tpu_custom_call.1} parent=5 // pred_fallthru
      _
    %p428 = scmp.le.s32.totalorder 2, %s9
    // Predicated region
    $region44: #{tpu_custom_call.1} parent=5 // pred_check
      %p429 = pneg %p428
    $region45: #{tpu_custom_call.1} parent=5 // pred_check_branch
      %431 = sbr.rel (%p429) target = $region47
    $region46: #{tpu_custom_call.1} parent=5 // pred_region
      %s432 = ssub.s32 %s9, 2
      // Predicated region
      $region48: #{tpu_custom_call.1} parent=46 // pred_check
        %p433 = pneg %p132
      $region49: #{tpu_custom_call.1} parent=46 // pred_check_branch
        %435 = sbr.rel (%p433) target = $region51
      $region50: #{tpu_custom_call.1} parent=46 // pred_region
        %p436 = scmp.lt.s32.totalorder %s20, 1
        %s437 = scalar_select %p436, %s20, 1
        %p438 = scmp.lt.s32.totalorder %s21, 0
        %s439 = scalar_select %p438, %s21, 0
        %s440 = smul.addr %s437, 16
        %s441 = sadd.s32 %s439, %s440
        %s442 = smul.addr %s441, 8
        %s443 = scalar_lea.vmem %s3, %s442
      $region51: #{tpu_custom_call.1} parent=46 // pred_fallthru
        _
    $region47: #{tpu_custom_call.1} parent=5 // pred_fallthru
      _
  $region6: #{tpu_custom_call.1} parent=0 // loop_footer
    %s13 = sadd.s32 1, %s9
  $region7: #{tpu_custom_call.1} parent=0 // loop_footer_branch
    %8 = sbr.rel target = $region3
  $region8: #{tpu_custom_call.1} parent=0 // loop_exit
    _

</llo_original>
